<compile_context>
chip_gen: v6e
topology: v6e:2x2x1
jax: 0.10.0
libtpu: 0.0.40
codegen_flags: <defaults>
</compile_context>

<pallas_src>
import jax
import jax.numpy as jnp
from jax.experimental import pallas as pl
from jax.experimental.pallas import tpu as pltpu


def _round_up(n, m):
    return ((n + m - 1) // m) * m


def _lff_kernel(x_ref, w2_ref, phase_ref, o_ref):
    x = x_ref[...].astype(jnp.float32)
    w2 = w2_ref[...].astype(jnp.float32)
    # MXU matmul even for tiny K: keeps the contraction off the VALU slot,
    # which the sin polynomial below is the likely binding unit for.
    proj = jnp.dot(x, w2, preferred_element_type=jnp.float32)
    # cos(t) == sin(t + pi/2): the phase fold gives a single transcendental
    # code path and a single full-width (tm, 2H) store.
    proj = proj + phase_ref[...]
    o_ref[...] = jnp.sin(proj).astype(o_ref.dtype)


def learnable_fourier_features(x, weight_t, *, tm=1024, out_dtype=None):
    """x: (M, K), weight_t: (K, H)  ->  (M, 2H) = [sin(xW), cos(xW)].

    tm: row-tile size (rows per grid step). Rounded to the output dtype's
        sublane pack and capped so the grid has at least 2 tiles (megacore).
    out_dtype: output dtype (default: x.dtype). bf16 halves HBM write traffic
        if the consumer tolerates it.
    """
    M, K = x.shape
    K2, H = weight_t.shape
    assert K == K2, (K, K2)
    out_features = 2 * H
    out_dtype = jnp.dtype(out_dtype) if out_dtype is not None else jnp.dtype(x.dtype)

    # Fused weight [W | W] and additive phase row [0..0, pi/2..pi/2] (tiny, built once).
    w2 = jnp.concatenate([weight_t, weight_t], axis=-1).astype(weight_t.dtype)  # (K, 2H)
    phase = jnp.concatenate(
        [jnp.zeros((1, H), jnp.float32),
         jnp.full((1, H), jnp.pi / 2, jnp.float32)], axis=-1)                   # (1, 2H)

    # Sublane pack for the output dtype: 8 (4B), 16 (2B), 32 (1B).
    sub = {4: 8, 2: 16, 1: 32}.get(out_dtype.itemsize, 8)
    # Round tm, then cap so the grid has >= 2 row tiles for the 2 TCs on v7x.
    tm = max(sub, _round_up(tm, sub))
    tm = min(tm, _round_up(pl.cdiv(M, 2), sub))
    grid = (pl.cdiv(M, tm),)  # partial last block handled by Pallas (no pad / slice)

    cost = pl.CostEstimate(
        flops=2 * M * out_features * K + M * out_features,   # matmul + phase add
        transcendentals=M * out_features,                    # one sin per output element
        bytes_accessed=(
            M * K * jnp.dtype(x.dtype).itemsize
            + (K * out_features) * jnp.dtype(w2.dtype).itemsize
            + out_features * 4
            + M * out_features * out_dtype.itemsize
        ),
    )

    return pl.pallas_call(
        _lff_kernel,
        out_shape=jax.ShapeDtypeStruct((M, out_features), out_dtype),
        grid_spec=pltpu.PrefetchScalarGridSpec(
            num_scalar_prefetch=0,
            grid=grid,
            in_specs=[
                # x: row tiles marching down M.
                pl.BlockSpec((tm, K), lambda i: (i, 0)),
                # fused weight: constant index map -> resident in VMEM.
                pl.BlockSpec((K, out_features), lambda i: (0, 0)),
                # phase row: constant index map -> resident in VMEM.
                pl.BlockSpec((1, out_features), lambda i: (0, 0)),
            ],
            out_specs=pl.BlockSpec((tm, out_features), lambda i: (i, 0)),
        ),
        compiler_params=pltpu.CompilerParams(
            # Independent row tiles -> shard across TensorCores (megacore / v7x).
            dimension_semantics=("parallel",),
        ),
        cost_estimate=cost,
    )(x, w2, phase)


if __name__ == "__main__":
    # Small shapes consistent with the module's forward:
    #   batch=2, seq=8, in_features=4, out_features=32  (half = 16)
    batch, seq, in_features, out_features = 2, 8, 4, 32
    half = out_features // 2

    key = jax.random.PRNGKey(0)
    k_x, k_w = jax.random.split(key)

    inp = jax.random.normal(k_x, (batch, seq, in_features), dtype=jnp.float32)
    # Deterministic init matching reset_parameters(): N(0, std=12), shape (H, K)
    w_pt = 12.0 * jax.random.normal(k_w, (half, in_features), dtype=jnp.float32)
    w_t = w_pt.T  # (K, H) layout used by the kernel

    # Flatten leading dims for the kernel, restore afterwards.
    x2d = inp.reshape(batch * seq, in_features)
    out2d = learnable_fourier_features(x2d, w_t)
    out = out2d.reshape(batch, seq, out_features)
    jax.block_until_ready(out)

    # Pure-JAX reference check.  cos is computed as sin(t + pi/2) in-kernel,
    # which differs from jnp.cos at the ulp level for large |proj| (std=12
    # weights make |proj|~O(50) common), so the tolerance is slightly loose.
    proj_ref = inp @ w_pt.T
    out_ref = jnp.concatenate([jnp.sin(proj_ref), jnp.cos(proj_ref)], axis=-1)
    assert out.shape == (batch, seq, out_features)
    assert jnp.allclose(out, out_ref, atol=3e-5, rtol=1e-5)

    # Also exercise the tiled path with a row count that isn't a tile multiple
    # (partial last block handled by Pallas, no host-side pad/slice).
    M2 = 1000
    xbig = jax.random.normal(jax.random.PRNGKey(1), (M2, in_features), jnp.float32)
    obig = learnable_fourier_features(xbig, w_t, tm=256)
    jax.block_until_ready(obig)
    proj_big = xbig @ w_pt.T
    ref_big = jnp.concatenate([jnp.sin(proj_big), jnp.cos(proj_big)], axis=-1)
    assert obig.shape == (M2, out_features)
    assert jnp.allclose(obig, ref_big, atol=3e-5, rtol=1e-5)

    print("KERNEL_OK")
</pallas_src>

<mosaic_0001>
module attributes {stable_mosaic.version = 11 : i64} {
  func.func @_lff_kernel(%arg0: i32, %arg1: memref<8x4xf32, #tpu.memory_space<vmem>>, %arg2: memref<4x32xf32, #tpu.memory_space<vmem>>, %arg3: memref<1x32xf32, #tpu.memory_space<vmem>>, %arg4: memref<8x32xf32, #tpu.memory_space<vmem>>) attributes {dimension_semantics = [#tpu.dimension_semantics<parallel>], iteration_bounds = array<i64: 2>, scalar_prefetch = 0 : i64, scratch_operands = 0 : i64, tpu.core_type = #tpu.core_type<tc>, window_params = [{transform_indices = @transform_0, window_bounds = array<i64: 8, 4>}, {pipeline_mode = #tpu.pipeline_mode<synchronous>, transform_indices = @transform_1, window_bounds = array<i64: 4, 32>}, {pipeline_mode = #tpu.pipeline_mode<synchronous>, transform_indices = @transform_2, window_bounds = array<i64: 1, 32>}, {transform_indices = @transform_3, window_bounds = array<i64: 8, 32>}]} {
    %c0 = arith.constant 0 : index
    %c0_0 = arith.constant 0 : index
    %0 = vector.load %arg1[%c0, %c0_0] : memref<8x4xf32, #tpu.memory_space<vmem>>, vector<8x4xf32>
    %c0_1 = arith.constant 0 : index
    %c0_2 = arith.constant 0 : index
    %1 = vector.load %arg2[%c0_1, %c0_2] : memref<4x32xf32, #tpu.memory_space<vmem>>, vector<4x32xf32>
    %cst = arith.constant dense<0.000000e+00> : vector<8x32xf32>
    %2 = tpu.matmul %0, %1, %cst {dimension_numbers = #tpu.dot_dimension_numbers<[1], [0], [0], [1], [0, 0, 1, 1], [], []>} : vector<8x4xf32>, vector<4x32xf32>, vector<8x32xf32> -> vector<8x32xf32>
    %c0_3 = arith.constant 0 : index
    %c0_4 = arith.constant 0 : index
    %3 = vector.load %arg3[%c0_3, %c0_4] : memref<1x32xf32, #tpu.memory_space<vmem>>, vector<1x32xf32>
    %4 = vector.broadcast %3 : vector<1x32xf32> to vector<8x32xf32>
    %5 = arith.addf %2, %4 : vector<8x32xf32>
    %6 = math.sin %5 : vector<8x32xf32>
    %c0_5 = arith.constant 0 : index
    %c0_6 = arith.constant 0 : index
    %7 = vector.load %arg4[%c0_5, %c0_6] : memref<8x32xf32, #tpu.memory_space<vmem>>, vector<8x32xf32>
    tpu.vector_store %arg4[%c0_5, %c0_6], %6 {strides = array<i32>} : memref<8x32xf32, #tpu.memory_space<vmem>>, vector<8x32xf32>,
    return
  }
  func.func @transform_0(%arg0: i32) -> (i32, i32) {
    %c0_i32 = arith.constant 0 : i32
    %c0_i32_0 = arith.constant 0 : i32
    return %arg0, %c0_i32 : i32, i32
  }
  func.func @transform_1(%arg0: i32) -> (i32, i32) {
    %c0_i32 = arith.constant 0 : i32
    %c0_i32_0 = arith.constant 0 : i32
    %c0_i32_1 = arith.constant 0 : i32
    return %c0_i32, %c0_i32_0 : i32, i32
  }
  func.func @transform_2(%arg0: i32) -> (i32, i32) {
    %c0_i32 = arith.constant 0 : i32
    %c0_i32_0 = arith.constant 0 : i32
    %c0_i32_1 = arith.constant 0 : i32
    return %c0_i32, %c0_i32_0 : i32, i32
  }
  func.func @transform_3(%arg0: i32) -> (i32, i32) {
    %c0_i32 = arith.constant 0 : i32
    %c0_i32_0 = arith.constant 0 : i32
    return %arg0, %c0_i32 : i32, i32
  }
}

</mosaic_0001>

<llo_original>
// kernel: tpu_custom_call.1
$region0: #{tpu_custom_call.1}
  #allocation0 [shape = 'u32[]', space=smem, size = 0x4, offset = 0x4, fixed_abs, tag = 'smem constant byte address 0x4 - core index']
  #allocation1 [shape = 'u32[144,128]{1,0:T(1,128)}', space=vmem, size = 0x12000, scoped, tag = 'internal scratch']
  %s0 = inlined_call_operand.vmem [shape: f32[16,4], index: 0, kind: input, shape index: {}]
  %s1 = inlined_call_operand.vmem [shape: f32[4,32], index: 1, kind: input, shape index: {}]
  %s2 = inlined_call_operand.vmem [shape: f32[1,32], index: 2, kind: input, shape index: {}]
  %s3 = inlined_call_operand.hbm [shape: f32[16,32], index: 3, kind: output, shape index: {}]
  %s4 = sld [smem:[#allocation0]]
  $region45: #{tpu_custom_call.1} parent=0
    _
  %s6 = ssub.s32 1, %s4
  %s7 = scalar_select 0, %s6, %s4
  $region1: #{tpu_custom_call.1} parent=0
    #allocation2 [shape = 'u8[8192]{0}', space=vmem, size = 0x2000, scoped, tag = 'output window, operand 0']
    #allocation3 [shape = 's32[2]{0}', space=sflag, size = 0x8, scoped, tag = 'scoped memory for tpu_custom_call.1']
    %8 = vsyncpa [#allocation3], 0
    %s9 = scalar_lea.sflag [#allocation3], 1
    %10 = vsyncpa %s9, 0
    loop: start=0, step=1, limit=4
    $region2: #{tpu_custom_call.1} parent=1 // loop_pre_header
      _
    $region3: #{tpu_custom_call.1} parent=1 // loop_header
      %s12 = sphi 0, %s16
      %p13 = scmp.ge.s32.totalorder %s12, 4
      %s22 = sphi 0, %s24
      %s25 = sphi 0, %s22
      %s26 = sphi 0, %s25
      %s42 = sphi 0, %s26
      %s46 = sphi 0, %s46
      %s48 = sphi 0, %s46
      %s49 = sphi 0, %s48
      %s63 = sphi 0, %s49
      %s67 = sphi 0, %s67
      %s69 = sphi 0, %s67
      %s70 = sphi 0, %s69
      %s84 = sphi 0, %s70
      %s90 = sphi 0, %s92
      %s93 = sphi 0, %s90
      %s94 = sphi 0, %s93
      %s110 = sphi 0, %s94
    $region4: #{tpu_custom_call.1} parent=1 // loop_header_branch
      %15 = sbr.rel (%p13) target = $region8
    $region5: #{tpu_custom_call.1} parent=1 // loop_body
      %s17 = ssub.s32 %s12, 1
      %s18 = ssub.s32 %s12, 2
      %s19 = sadd.s32 %s12, 1
      %s20 = ssub.s32 %s12, %s19
      %p21 = scmp.eq.s32.totalorder %s20, 0
      %s23 = sadd.s32 %s22, 1
      %s24 = scalar_select %p21, %s22, %s23
      %p27 = pneg %p21
      %p28 = scmp.eq.s32.totalorder %s12, 1
      %p29 = por %p27, %p28
      %p30 = scmp.ne.s32.totalorder %s22, %s25
      %p31 = scmp.eq.s32.totalorder %s12, 0
      %p32 = por %p30, %p31
      %p33 = scmp.ne.s32.totalorder %s22, %s25
      %p34 = scmp.eq.s32.totalorder %s17, 1
      %p35 = por %p33, %p34
      %p36 = scmp.ne.s32.totalorder %s25, %s26
      %p37 = scmp.eq.s32.totalorder %s17, 0
      %p38 = por %p36, %p37
      %p39 = scmp.ne.s32.totalorder %s25, %s26
      %p40 = scmp.eq.s32.totalorder %s18, 1
      %p41 = por %p39, %p40
      %p43 = scmp.ne.s32.totalorder %s26, %s42
      %p44 = scmp.eq.s32.totalorder %s18, 0
      %p45 = por %p43, %p44
      %s47 = sadd.s32 %s46, 1
      %p50 = scmp.eq.s32.totalorder %s12, 1
      %p51 = scmp.ne.s32.totalorder %s46, %s48
      %p52 = scmp.eq.s32.totalorder %s12, 0
      %p53 = por %p51, %p52
      %p54 = scmp.ne.s32.totalorder %s46, %s48
      %p55 = scmp.eq.s32.totalorder %s17, 1
      %p56 = por %p54, %p55
      %p57 = scmp.ne.s32.totalorder %s48, %s49
      %p58 = scmp.eq.s32.totalorder %s17, 0
      %p59 = por %p57, %p58
      %p60 = scmp.ne.s32.totalorder %s48, %s49
      %p61 = scmp.eq.s32.totalorder %s18, 1
      %p62 = por %p60, %p61
      %p64 = scmp.ne.s32.totalorder %s49, %s63
      %p65 = scmp.eq.s32.totalorder %s18, 0
      %p66 = por %p64, %p65
      %s68 = sadd.s32 %s67, 1
      %p71 = scmp.eq.s32.totalorder %s12, 1
      %p72 = scmp.ne.s32.totalorder %s67, %s69
      %p73 = scmp.eq.s32.totalorder %s12, 0
      %p74 = por %p72, %p73
      %p75 = scmp.ne.s32.totalorder %s67, %s69
      %p76 = scmp.eq.s32.totalorder %s17, 1
      %p77 = por %p75, %p76
      %p78 = scmp.ne.s32.totalorder %s69, %s70
      %p79 = scmp.eq.s32.totalorder %s17, 0
      %p80 = por %p78, %p79
      %p81 = scmp.ne.s32.totalorder %s69, %s70
      %p82 = scmp.eq.s32.totalorder %s18, 1
      %p83 = por %p81, %p82
      %p85 = scmp.ne.s32.totalorder %s70, %s84
      %p86 = scmp.eq.s32.totalorder %s18, 0
      %p87 = por %p85, %p86
      %s88 = ssub.s32 %s12, %s19
      %p89 = scmp.eq.s32.totalorder %s88, 0
      %s91 = sadd.s32 %s90, 1
      %s92 = scalar_select %p89, %s90, %s91
      %p95 = pneg %p89
      %p96 = scmp.eq.s32.totalorder %s12, 1
      %p97 = por %p95, %p96
      %p98 = scmp.ne.s32.totalorder %s90, %s93
      %p99 = scmp.eq.s32.totalorder %s12, 0
      %p100 = por %p98, %p99
      %p101 = scmp.ne.s32.totalorder %s90, %s93
      %p102 = scmp.eq.s32.totalorder %s17, 1
      %p103 = por %p101, %p102
      %p104 = scmp.ne.s32.totalorder %s93, %s94
      %p105 = scmp.eq.s32.totalorder %s17, 0
      %p106 = por %p104, %p105
      %p107 = scmp.ne.s32.totalorder %s93, %s94
      %p108 = scmp.eq.s32.totalorder %s18, 1
      %p109 = por %p107, %p108
      %p111 = scmp.ne.s32.totalorder %s94, %s110
      %p112 = scmp.eq.s32.totalorder %s18, 0
      %p113 = por %p111, %p112
      %p114 = scmp.le.s32.totalorder 1, %s12
      %p115 = scmp.lt.s32.totalorder %s12, 3
      %p116 = pnand %p114, %p115
      %p117 = pneg %p116
      // Predicated region
      $region9: #{tpu_custom_call.1} parent=5 // pred_check
        _
      $region10: #{tpu_custom_call.1} parent=5 // pred_check_branch
        %119 = sbr.rel (%p116) target = $region12
      $region11: #{tpu_custom_call.1} parent=5 // pred_region
        %s120 = ssub.s32 %s12, 1
        // Predicated region
        $region13: #{tpu_custom_call.1} parent=11 // pred_check
          %p121 = pneg %p59
        $region14: #{tpu_custom_call.1} parent=11 // pred_check_branch
          %123 = sbr.rel (%p121) target = $region16
        $region15: #{tpu_custom_call.1} parent=11 // pred_region
          _
        $region16: #{tpu_custom_call.1} parent=11 // pred_fallthru
          _
        // Predicated region
        $region17: #{tpu_custom_call.1} parent=11 // pred_check
          %p124 = pneg %p80
        $region18: #{tpu_custom_call.1} parent=11 // pred_check_branch
          %126 = sbr.rel (%p124) target = $region20
        $region19: #{tpu_custom_call.1} parent=11 // pred_region
          _
        $region20: #{tpu_custom_call.1} parent=11 // pred_fallthru
          _
      $region12: #{tpu_custom_call.1} parent=5 // pred_fallthru
        _
      %p127 = scmp.lt.s32.totalorder %s12, 2
      // Predicated region
      $region21: #{tpu_custom_call.1} parent=5 // pred_check
        %p128 = pneg %p127
      $region22: #{tpu_custom_call.1} parent=5 // pred_check_branch
        %130 = sbr.rel (%p128) target = $region24
      $region23: #{tpu_custom_call.1} parent=5 // pred_region
        // Predicated region
        $region25: #{tpu_custom_call.1} parent=23 // pred_check
          %p131 = pneg %p32
        $region26: #{tpu_custom_call.1} parent=23 // pred_check_branch
          %133 = sbr.rel (%p131) target = $region28
        $region27: #{tpu_custom_call.1} parent=23 // pred_region
          %p134 = scmp.lt.s32.totalorder %s12, 1
          %s135 = scalar_select %p134, %s12, 1
          %s136 = smul.addr %s135, 8
          %s137 = scalar_lea.vmem %s0, %s136
        $region28: #{tpu_custom_call.1} parent=23 // pred_fallthru
          _
      $region24: #{tpu_custom_call.1} parent=5 // pred_fallthru
        _
      %p138 = scmp.le.s32.totalorder 1, %s12
      %p139 = scmp.lt.s32.totalorder %s12, 3
      %p140 = pnand %p138, %p139
      %p141 = pneg %p140
      // Predicated region
      $region29: #{tpu_custom_call.1} parent=5 // pred_check
        _
      $region30: #{tpu_custom_call.1} parent=5 // pred_check_branch
        %143 = sbr.rel (%p140) target = $region32
      $region31: #{tpu_custom_call.1} parent=5 // pred_region
        %s144 = ssub.s32 %s12, 1
        %p145 = scmp.lt.s32.totalorder %s17, 1
        %s146 = scalar_select %p145, %s17, 1
        %s147 = smul.addr %s146, 8
        %s148 = scalar_lea.vmem %s0, %s147
        %p149 = pneg %p38
        %p150 = pneg %p35
        %p151 = pneg %p59
        %p152 = pneg %p56
        %p153 = pneg %p80
        %p154 = pneg %p77
        %p155 = pneg %p106
        %p156 = pneg %p103
        %s157 = sand.u32 %s93, 1
        %s158 = scalar_lea.sflag [#allocation3], %s157
        %s159 = sand.u32 %s93, 1
        %s160 = smul.addr %s159, 8
        %s161 = scalar_lea.vmem [#allocation2], %s160
        %p162 = scmp.lt.s32.totalorder %s17, 1
        %s163 = scalar_select %p162, %s17, 1
        %s164 = smul.addr %s163, 8
        %s165 = scalar_lea.vmem %s0, %s164
        %v166 = vld [vmem:[%s165] sm:$0xff]
        %v167 = vld [vmem:[%s1] sm:$0xf]
        %v168 = vld [vmem:[%s2] sm:$0x1]
        %v170 = vlaneseq
        %v171 = vshrl.u32 %v170, 7
        %v172 = vsub.s32 0, %v171
        %v173 = vrot.slane %v168, %v172
        %vm175 = vcmask 31744
        %v177 = vsel %vm175, %v166, 0
        %vm179 = vcmask 1043456
        %v181 = vsel %vm179, %v167, 0
        %183 = vmatprep.subr.mxu0 0.0
        %184 = vmatpush1.msra.mxu0 0.0
        %185 = vmatprep.subr.mxu0 0.0
        %186 = vmatpush1.msra.mxu0 0.0
        %187 = vmatprep.subr.mxu0 0.0
        %188 = vmatpush1.msra.mxu0 0.0
        %189 = vmatprep.subr.mxu0 0.0
        %190 = vmatpush1.msra.mxu0 0.0
        %191 = vmatprep.subr.mxu0 0.0
        %192 = vmatpush1.msra.mxu0 0.0
        %193 = vmatprep.subr.mxu0 0.0
        %194 = vmatpush1.msra.mxu0 0.0
        %195 = vmatprep.subr.mxu0 0.0
        %196 = vmatpush1.msra.mxu0 0.0
        %197 = vmatprep.subr.mxu0 0.0
        %198 = vmatpush1.msra.mxu0 0.0
        %199 = vmatprep.subr.mxu0 0.0
        %200 = vmatpush1.msra.mxu0 0.0
        %201 = vmatprep.subr.mxu0 0.0
        %202 = vmatpush1.msra.mxu0 0.0
        %203 = vmatprep.subr.mxu0 0.0
        %204 = vmatpush1.msra.mxu0 0.0
        %205 = vmatprep.subr.mxu0 0.0
        %206 = vmatpush1.msra.mxu0 0.0
        %207 = vmatprep.subr.mxu0 0.0
        %208 = vmatpush1.msra.mxu0 0.0
        %209 = vmatprep.subr.mxu0 0.0
        %210 = vmatpush1.msra.mxu0 0.0
        %211 = vmatprep.subr.mxu0 0.0
        %212 = vmatpush1.msra.mxu0 0.0
        %213 = vmatprep.subr.mxu0 0.0
        %214 = vmatpush1.msra.mxu0 %v181
        %215 = vmatprep.subr.mxu0 0.0
        %216 = vmatpush2.msra.mxu0 0.0
        %217 = vmatprep.subr.mxu0 0.0
        %218 = vmatpush2.msra.mxu0 0.0
        %219 = vmatprep.subr.mxu0 0.0
        %220 = vmatpush2.msra.mxu0 0.0
        %221 = vmatprep.subr.mxu0 0.0
        %222 = vmatpush2.msra.mxu0 0.0
        %223 = vmatprep.subr.mxu0 0.0
        %224 = vmatpush2.msra.mxu0 0.0
        %225 = vmatprep.subr.mxu0 0.0
        %226 = vmatpush2.msra.mxu0 0.0
        %227 = vmatprep.subr.mxu0 0.0
        %228 = vmatpush2.msra.mxu0 0.0
        %229 = vmatprep.subr.mxu0 0.0
        %230 = vmatpush2.msra.mxu0 0.0
        %231 = vmatprep.subr.mxu0 0.0
        %232 = vmatpush2.msra.mxu0 0.0
        %233 = vmatprep.subr.mxu0 0.0
        %234 = vmatpush2.msra.mxu0 0.0
        %235 = vmatprep.subr.mxu0 0.0
        %236 = vmatpush2.msra.mxu0 0.0
        %237 = vmatprep.subr.mxu0 0.0
        %238 = vmatpush2.msra.mxu0 0.0
        %239 = vmatprep.subr.mxu0 0.0
        %240 = vmatpush2.msra.mxu0 0.0
        %241 = vmatprep.subr.mxu0 0.0
        %242 = vmatpush2.msra.mxu0 0.0
        %243 = vmatprep.subr.mxu0 0.0
        %244 = vmatpush2.msra.mxu0 0.0
        %245 = vmatprep.subr.mxu0 0.0
        %246 = vmatpush2.msra.mxu0 0.0
        %247 = vmatprep.mubr.f32.mxu0 0.0
        %248 = vmatmul.mubr.f32.gmra.mxu0 %v177
        %v249 = vpop.f32.mrf.mxu0
        %v250 = vadd.f32 %v173, %v249
        %v251 = vpop.f32.mrf.mxu0
        %252 = vdwg.mxu0
        %v253 = vand.u32 2147483647, %v250
        %vm254 = vcmp.le.f32.partialorder %v253, 0.7853982
        %vm255 = vcmp.lt.s32.totalorder %v250, 0
        %v256 = vand.u32 %v250, 2139095040
        %v257 = vshrl.u32 %v256, 23
        %v258 = vsub.s32 %v257, 127
        %v259 = vand.u32 2147483647, %v250
        %v260 = vand.u32 %v259, 8388607
        %v261 = vor.u32 %v260, 8388608
        %v262 = vsub.s32 0, %v261
        %v263 = vadd.s32 %v258, 1
        %vm264 = vcmp.gt.s32.totalorder %v263, 0
        %v265 = vsel %vm264, %v263, 0
        %v266 = vshrl.u32 %v265, 5
        %v267 = vand.u32 %v265, 31
        %v268 = vsub.s32 32, %v267
        %v269 = vshrl.u32 683565275, %v268
        %v270 = vshll.u32 683565275, %v267
        %v271 = vshrl.u32 2475754826, %v268
        %v272 = vor.u32 %v270, %v271
        %v273 = vshll.u32 2475754826, %v267
        %v274 = vshrl.u32 2131351028, %v268
        %v275 = vor.u32 %v273, %v274
        %v276 = vshll.u32 2131351028, %v267
        %v277 = vshrl.u32 2102212464, %v268
        %v278 = vor.u32 %v276, %v277
        %v279 = vshll.u32 2102212464, %v267
        %v280 = vshrl.u32 920167782, %v268
        %v281 = vor.u32 %v279, %v280
        %v282 = vshll.u32 920167782, %v267
        %v283 = vshrl.u32 1326507024, %v268
        %v284 = vor.u32 %v282, %v283
        %vm285 = vcmp.lt.s32.totalorder %v266, 1
        %vm286 = vcmp.lt.s32.totalorder %v266, 2
        %vm287 = vcmp.lt.s32.totalorder %v266, 3
        %vm288 = vcmp.lt.s32.totalorder %v266, 4
        %v289 = vsel %vm285, %v269, %v272
        %v290 = vsel %vm288, %v278, 2102212464
        %v291 = vsel %vm287, %v275, %v290
        %v292 = vsel %vm286, %v289, %v291
        %v293 = vsel %vm285, %v272, %v275
        %v294 = vsel %vm288, %v281, 920167782
        %v295 = vsel %vm287, %v278, %v294
        %v296 = vsel %vm286, %v293, %v295
        %v297 = vsel %vm285, %v275, %v278
        %v298 = vsel %vm288, %v284, 1326507024
        %v299 = vsel %vm287, %v281, %v298
        %v300 = vsel %vm286, %v297, %v299
        %v301 = vshll.u32 %v261, 8
        %v302 = vmul.u32.u64.compose %v301, %v300
        %v303 = vextract.low.u32 %v302
        %v304 = vextract.high.u32 %v302
        %v305 = vmul.u32.u64.compose %v301, %v296
        %v306 = vextract.low.u32 %v305
        %v307 = vextract.high.u32 %v305
        %v308 = vmul.u32 %v301, %v292
        %v309 = vadd.s32 %v304, %v306
        %vm310 = vc.u32 %v304, %v306
        %v311 = vadd.s32 %v307, 1
        %v312 = vsel %vm310, %v311, %v307
        %v313 = vadd.s32 %v308, %v312
        %v314 = vadd.s32 %v313, 536870912
        %v315 = vshrl.u32 %v314, 30
        %v316 = vshll.u32 %v315, 30
        %v317 = vsub.s32 %v313, %v316
        %vm318 = vcmp.lt.s32.totalorder %v317, 0
        %v319 = vsub.s32 0, %v317
        %v320 = vsel %vm318, %v319, %v317
        %v321 = vclz %v320
        %v322 = vsub.s32 %v321, 2
        %vm323 = vcmp.gt.s32.totalorder 0, %v322
        %v324 = vsel %vm323, 0, %v322
        %v325 = vsub.s32 32, %v324
        %v326 = vshll.u32 %v317, %v324
        %v327 = vshrl.u32 %v309, %v325
        %v328 = vor.u32 %v326, %v327
        %v329 = vsub.s32 4294967266, %v324
        %v330 = vadd.s32 %v329, 127
        %v331 = vshll.u32 %v330, 23
        %v332 = vor.u32 4788187, %v331
        %v333 = vand.u32 2147483647, %v332
        %v335 = vcvt.s32.f32 %v328
        %v336 = vmul.f32 %v335, %v333
        %v337 = vxor.u32 %v336, 2147483648
        %v338 = vsel %vm255, %v337, %v336
        %v339 = vsub.s32 4, %v315
        %v340 = vsel %vm255, %v339, %v315
        %v341 = vsel %vm254, %v250, %v338
        %v342 = vsel %vm254, 0, %v340
        %v343 = vcosq.f32.pop %v341
        %v344 = vsinq.f32.pop %v341
        %vm345 = vweird.f32 %v250
        %v346 = vadd.s32 %v342, 3
        %v347 = vand.u32 %v346, 3
        %vm348 = vcmp.lt.s32.totalorder %v347, 2
        %vm349 = vcmp.eq.s32.totalorder %v347, 0
        %v350 = vxor.u32 %v344, 2147483648
        %v351 = vsel %vm349, %v343, %v350
        %vm352 = vcmp.eq.s32.totalorder %v347, 2
        %v353 = vxor.u32 %v343, 2147483648
        %v354 = vsel %vm352, %v353, %v344
        %v355 = vsel %vm348, %v351, %v354
        %v356 = vsel %vm345, nan, %v355
        %vm357 = vcmask 261120
        %358 = vst.msk [vmem:[%s161] sm:$0xff] %vm357, %v356
        %s359 = sand.u32 %s93, 1
        %s360 = scalar_lea.sflag [#allocation3], %s359
        %s361 = sand.u32 %s93, 1
        %s362 = smul.addr %s361, 8
        %s363 = scalar_lea.vmem [#allocation2], %s362
        // Predicated region
        $region33: #{tpu_custom_call.1} parent=31 // pred_check
          %p364 = pneg %p103
        $region34: #{tpu_custom_call.1} parent=31 // pred_check_branch
          %366 = sbr.rel (%p364) target = $region36
        $region35: #{tpu_custom_call.1} parent=31 // pred_region
          %s368 = ssub.s32 128, 128
          %369 = vsyncadd %s360, %s368
          %s370 = smul.addr %s17, 128
          %s371 = scalar_lea.hbm %s3, %s370
          %s373 = sshll.u32 %s363, 4
          %s374 = int_to_ptr.vmem [resolvable:$true] %s373
          %376 = dma.vmem_to_hbm [thread:$0]  %s374, 128, %s371, %s360
        $region36: #{tpu_custom_call.1} parent=31 // pred_fallthru
          _
      $region32: #{tpu_custom_call.1} parent=5 // pred_fallthru
        _
      %p377 = scmp.le.s32.totalorder 2, %s12
      // Predicated region
      $region37: #{tpu_custom_call.1} parent=5 // pred_check
        %p378 = pneg %p377
      $region38: #{tpu_custom_call.1} parent=5 // pred_check_branch
        %380 = sbr.rel (%p378) target = $region40
      $region39: #{tpu_custom_call.1} parent=5 // pred_region
        %s381 = ssub.s32 %s12, 2
        // Predicated region
        $region41: #{tpu_custom_call.1} parent=39 // pred_check
          %p382 = pneg %p109
        $region42: #{tpu_custom_call.1} parent=39 // pred_check_branch
          %384 = sbr.rel (%p382) target = $region44
        $region43: #{tpu_custom_call.1} parent=39 // pred_region
          %s385 = sand.u32 %s94, 1
          %s386 = scalar_lea.sflag [#allocation3], %s385
          %s387 = sand.u32 %s94, 1
          %s388 = smul.addr %s387, 8
          %s389 = scalar_lea.vmem [#allocation2], %s388
          %390 = dma.done %s386, 128
        $region44: #{tpu_custom_call.1} parent=39 // pred_fallthru
          _
      $region40: #{tpu_custom_call.1} parent=5 // pred_fallthru
        _
    $region6: #{tpu_custom_call.1} parent=1 // loop_footer
      %s16 = sadd.s32 1, %s12
    $region7: #{tpu_custom_call.1} parent=1 // loop_footer_branch
      %11 = sbr.rel target = $region3
    $region8: #{tpu_custom_call.1} parent=1 // loop_exit
      _
    %391 = vsyncpa [#allocation3], 1
    %s392 = scalar_lea.sflag [#allocation3], 1
    %393 = vsyncpa %s392, 1

</llo_original>
